<compile_context>
chip_gen: v7x
topology: tpu7x:2x2x1
jax: 0.10.0
libtpu: 0.0.40
codegen_flags: <defaults>
</compile_context>

<pallas_src>
import functools

import jax
import jax.numpy as jnp
from jax import lax
from jax.experimental import pallas as pl
from jax.experimental.pallas import tpu as pltpu


def _round_up(x, m):
    return -(-x // m) * m


def _vmem_budget_bytes():
    """Generation-aware VMEM budget.

    ~108 MiB on v5e/v6e (128 MiB physical), ~48 MiB on v7x (64 MiB physical),
    always leaving headroom for compiler-internal scratch.
    """
    cap = 64 * 1024 * 1024
    try:
        cap = int(getattr(pltpu.get_tpu_info(), "vmem_capacity_bytes", cap))
    except Exception:
        pass
    return max(min(cap - (16 << 20), int(cap * 0.85)), 16 << 20)


def _seq_tile(s, pref):
    """Largest multiple-of-8 divisor of s that is <= pref, else the full s."""
    if s <= pref:
        return s
    t = (pref // 8) * 8
    while t >= 8:
        if s % t == 0:
            return t
        t -= 8
    return s


# -----------------------------------------------------------------------------
# Kernel 1: tiled dense layer   out = x @ w + b
#   x : [M, K]  bf16      w : [K, N]  bf16      b : [1, N]  f32
# Grid (M/tm, N/tn, K/tk); f32 VMEM accumulator across the K axis; bf16 MXU
# inputs; output dtype selectable (bf16 for intermediates, f32 for fc_out).
# -----------------------------------------------------------------------------
def linear_kernel(x_ref, w_ref, b_ref, o_ref, acc_ref):
    k = pl.program_id(2)

    @pl.when(k == 0)
    def _():
        acc_ref[...] = jnp.zeros_like(acc_ref)

    acc_ref[...] += jnp.dot(x_ref[...], w_ref[...],
                            preferred_element_type=jnp.float32)

    @pl.when(k == pl.num_programs(2) - 1)
    def _():
        o_ref[...] = (acc_ref[...] + b_ref[...]).astype(o_ref.dtype)


def _pick_linear_tiles(M, K, N, budget):
    """Pick (tm, tn, tk) so double-buffered bf16 inputs + f32 acc fit the budget."""
    cap = budget // 2                      # leave headroom for compiler scratch
    tk = K if K <= 2048 else 1024          # whole-K for typical ViT d_model
    m_cap = _round_up(M, 8)
    n_cap = _round_up(N, 128)

    def usage(tm, tn):
        return (2 * tm * tk * 2            # x tiles (bf16, double-buffered)
                + 2 * tk * tn * 2          # w tiles
                + tm * tn * 4              # f32 accumulator
                + 2 * tm * tn * 4          # output tiles (upper bound: f32)
                + 2 * tn * 4)              # bias

    for tm in (512, 256, 128, 64, 32, 16, 8):
        for tn in (512, 256, 128):
            tm_c, tn_c = min(tm, m_cap), min(tn, n_cap)
            if usage(tm_c, tn_c) <= cap:
                return tm_c, tn_c, tk
    return min(8, m_cap), min(128, n_cap), min(tk, 512)


def pallas_linear(x2d, w, b, out_dtype=jnp.float32):
    M, K = x2d.shape
    K2, N = w.shape
    assert K == K2
    budget = _vmem_budget_bytes()
    tm, tn, tk = _pick_linear_tiles(M, K, N, budget)

    # Pad every dimension up to a tile multiple (zero rows/cols are harmless
    # for the contraction; padded output columns/rows are sliced off below).
    Mp, Kp, Np = _round_up(M, tm), _round_up(K, tk), _round_up(N, tn)
    if (Mp, Kp) != (M, K):
        x2d = jnp.pad(x2d, ((0, Mp - M), (0, Kp - K)))
    if (Kp, Np) != (K, N):
        w = jnp.pad(w, ((0, Kp - K), (0, Np - N)))
    if Np != N:
        b = jnp.pad(b, ((0, 0), (0, Np - N)))

    # TODO(synk): if profiling shows exposed DMA for skinny M, add
    # pipeline_mode=pl.Buffered(3) to the x/w BlockSpecs (budget permitting).
    out = pl.pallas_call(
        linear_kernel,
        out_shape=jax.ShapeDtypeStruct((Mp, Np), out_dtype),
        grid_spec=pltpu.PrefetchScalarGridSpec(
            num_scalar_prefetch=0,
            grid=(Mp // tm, Np // tn, Kp // tk),
            in_specs=[
                pl.BlockSpec((tm, tk), lambda i, j, k: (i, k)),
                pl.BlockSpec((tk, tn), lambda i, j, k: (k, j)),
                pl.BlockSpec((1, tn), lambda i, j, k: (0, j)),
            ],
            out_specs=pl.BlockSpec((tm, tn), lambda i, j, k: (i, j)),
            scratch_shapes=[pltpu.VMEM((tm, tn), jnp.float32)],
        ),
        compiler_params=pltpu.CompilerParams(
            dimension_semantics=("parallel", "parallel", "arbitrary"),
            vmem_limit_bytes=budget,
        ),
    )(x2d, w, b)

    if (Mp, Np) != (M, N):
        out = out[:M, :N]
    return out


# -----------------------------------------------------------------------------
# Kernel 2: flash-style multi-head attention over the fused q|k|v slab.
#   qkv_q_ref  : [1, tq,  3*d_model]   (q-row tiled stream of the qkv slab)
#   qkv_kv_ref : [1, tkv, 3*d_model]   (kv-row tiled stream of the same slab)
#   o_ref      : [1, tq,  d_model]     (lane-dense, bf16)
# Grid (B, S//tq, S//tkv); kv is the innermost (reduction) axis; per-head
# m/l/acc scratch implements the online softmax so [S, S] is never resident.
# -----------------------------------------------------------------------------
def flash_attn_kernel(qkv_q_ref, qkv_kv_ref, o_ref, m_sc, l_sc, acc_sc,
                      *, num_heads, d_k, scale):
    d_model = num_heads * d_k
    kv = pl.program_id(2)

    @pl.when(kv == 0)
    def _():
        m_sc[...] = jnp.full(m_sc.shape, -jnp.inf, dtype=m_sc.dtype)
        l_sc[...] = jnp.zeros(l_sc.shape, dtype=l_sc.dtype)
        acc_sc[...] = jnp.zeros(acc_sc.shape, dtype=acc_sc.dtype)

    for h in range(num_heads):
        # Per-head static slices of the fused slab; 1/sqrt(d_k) folded into q.
        q = (qkv_q_ref[0, :, pl.ds(h * d_k, d_k)].astype(jnp.float32)
             * scale).astype(jnp.bfloat16)                               # [tq, d_k]
        kb = qkv_kv_ref[0, :, pl.ds(d_model + h * d_k, d_k)]             # [tkv, d_k]
        vb = qkv_kv_ref[0, :, pl.ds(2 * d_model + h * d_k, d_k)]         # [tkv, d_k]

        # Contract the d_k axes directly (no explicit K transpose in-kernel).
        # TODO(synk): check the bundle dump for a hidden vxpose of kb; if it
        # shows up, emit K pre-transposed from the fused projection.
        s = lax.dot_general(
            q, kb,
            dimension_numbers=(((1,), (1,)), ((), ())),
            preferred_element_type=jnp.float32,
        )                                                                # [tq, tkv]

        # Online softmax update (f32 statistics).
        m_prev = m_sc[h]                                                 # [tq, 1]
        m_new = jnp.maximum(m_prev, jnp.max(s, axis=-1, keepdims=True))
        alpha = jnp.exp(m_prev - m_new)
        p = jnp.exp(s - m_new)

        l_sc[h] = alpha * l_sc[h] + jnp.sum(p, axis=-1, keepdims=True)
        acc_sc[h] = alpha * acc_sc[h] + jnp.dot(
            p.astype(jnp.bfloat16), vb, preferred_element_type=jnp.float32)
        m_sc[h] = m_new

    @pl.when(kv == pl.num_programs(2) - 1)
    def _():
        for h in range(num_heads):
            # Exact divide (not approx reciprocal) for parity with the reference.
            o_ref[0, :, pl.ds(h * d_k, d_k)] = (
                acc_sc[h] / l_sc[h]).astype(o_ref.dtype)


def pallas_attention(qkv, num_heads):
    # qkv: [B, S, 3*d_model] (bf16) -> out: [B, S, d_model] (bf16)
    B, S, three_dm = qkv.shape
    d_model = three_dm // 3
    d_k = d_model // num_heads
    tq = _seq_tile(S, 256)
    tkv = _seq_tile(S, 512)
    scale = 1.0 / float(d_k) ** 0.5
    budget = _vmem_budget_bytes()

    kernel = functools.partial(flash_attn_kernel, num_heads=num_heads,
                               d_k=d_k, scale=scale)

    return pl.pallas_call(
        kernel,
        out_shape=jax.ShapeDtypeStruct((B, S, d_model), jnp.bfloat16),
        grid_spec=pltpu.PrefetchScalarGridSpec(
            num_scalar_prefetch=0,
            grid=(B, S // tq, S // tkv),
            in_specs=[
                # Same array, two streams: q-row tiled and kv-row tiled.
                pl.BlockSpec((1, tq, three_dm), lambda b, qi, ki: (b, qi, 0)),
                pl.BlockSpec((1, tkv, three_dm), lambda b, qi, ki: (b, ki, 0)),
            ],
            out_specs=pl.BlockSpec((1, tq, d_model), lambda b, qi, ki: (b, qi, 0)),
            scratch_shapes=[
                pltpu.VMEM((num_heads, tq, 1), jnp.float32),    # running max
                pltpu.VMEM((num_heads, tq, 1), jnp.float32),    # running sum
                pltpu.VMEM((num_heads, tq, d_k), jnp.float32),  # accumulator
            ],
        ),
        compiler_params=pltpu.CompilerParams(
            dimension_semantics=("parallel", "parallel", "arbitrary"),
            vmem_limit_bytes=budget,
        ),
    )(qkv, qkv)


# -----------------------------------------------------------------------------
# MultiHeadAttention forward (parameters initialized deterministically)
# -----------------------------------------------------------------------------
def init_params(key, d_model):
    ks = jax.random.split(key, 8)
    scale = 1.0 / jnp.sqrt(jnp.float32(d_model))

    def linear_params(kw, kb):
        # PyTorch nn.Linear: weight [out, in], bias [out]; store weight as
        # [in, out] (bf16) so kernels compute x @ W^T directly.
        w = jax.random.uniform(kw, (d_model, d_model), jnp.float32, -scale, scale)
        b = jax.random.uniform(kb, (1, d_model), jnp.float32, -scale, scale)
        return w.T, b

    wq, bq = linear_params(ks[0], ks[1])
    wk, bk = linear_params(ks[2], ks[3])
    wv, bv = linear_params(ks[4], ks[5])
    wo, bo = linear_params(ks[6], ks[7])
    return {
        # Fused q|k|v projection: one bf16 weight [d_model, 3*d_model], f32 bias.
        "w_qkv": jnp.concatenate([wq, wk, wv], axis=1).astype(jnp.bfloat16),
        "b_qkv": jnp.concatenate([bq, bk, bv], axis=1),
        "w_out": wo.astype(jnp.bfloat16),
        "b_out": bo,
    }


def multi_head_attention(params, x, num_heads):
    B, S, d_model = x.shape
    x2d = x.reshape(B * S, d_model).astype(jnp.bfloat16)

    # Single fused projection; bf16 intermediate halves HBM traffic for the
    # write here and the read in the attention kernel.
    qkv = pallas_linear(x2d, params["w_qkv"], params["b_qkv"],
                        out_dtype=jnp.bfloat16)
    qkv = qkv.reshape(B, S, 3 * d_model)

    # Flash attention directly on the [B, S, 3*d_model] layout — no head
    # transposes in the wrapper; output is lane-dense [B, S, d_model] bf16.
    atten = pallas_attention(qkv, num_heads)

    out = pallas_linear(atten.reshape(B * S, d_model),
                        params["w_out"], params["b_out"],
                        out_dtype=jnp.float32)
    return out.reshape(B, S, d_model)


if __name__ == "__main__":
    B, S, d_model, num_heads = 2, 8, 32, 4

    key = jax.random.PRNGKey(0)
    k_param, k_x = jax.random.split(key)
    params = init_params(k_param, d_model)
    x = jax.random.normal(k_x, (B, S, d_model), dtype=jnp.float32)

    out = multi_head_attention(params, x, num_heads)
    jax.block_until_ready(out)

    assert out.shape == (B, S, d_model)
    print("KERNEL_OK")
</pallas_src>

<mosaic_0001>
module attributes {stable_mosaic.version = 11 : i64} {
  func.func @linear_kernel(%arg0: i32, %arg1: i32, %arg2: i32, %arg3: memref<16x32xbf16, #tpu.memory_space<vmem>>, %arg4: memref<32x128xbf16, #tpu.memory_space<vmem>>, %arg5: memref<1x128xf32, #tpu.memory_space<vmem>>, %arg6: memref<16x128xbf16, #tpu.memory_space<vmem>>, %arg7: memref<16x128xf32, #tpu.memory_space<vmem>>) attributes {dimension_semantics = [#tpu.dimension_semantics<parallel>, #tpu.dimension_semantics<parallel>, #tpu.dimension_semantics<arbitrary>], iteration_bounds = array<i64: 1, 1, 1>, scalar_prefetch = 0 : i64, scratch_operands = 1 : i64, tpu.core_type = #tpu.core_type<tc>, window_params = [{transform_indices = @transform_0, window_bounds = array<i64: 16, 32>}, {transform_indices = @transform_1, window_bounds = array<i64: 32, 128>}, {transform_indices = @transform_2, window_bounds = array<i64: 1, 128>}, {transform_indices = @transform_3, window_bounds = array<i64: 16, 128>}]} {
    %c0_i32 = arith.constant 0 : i32
    %0 = arith.cmpi eq, %arg2, %c0_i32 : i32
    %1 = arith.extui %0 : i1 to i32
    %c0_i32_0 = arith.constant 0 : i32
    %2 = arith.cmpi ne, %1, %c0_i32_0 : i32
    scf.if %2 {
      %cst_10 = arith.constant 0.000000e+00 : f32
      %12 = vector.broadcast %cst_10 : f32 to vector<16x128xf32>
      %c0_11 = arith.constant 0 : index
      %c0_12 = arith.constant 0 : index
      %13 = vector.load %arg7[%c0_11, %c0_12] : memref<16x128xf32, #tpu.memory_space<vmem>>, vector<16x128xf32>
      tpu.vector_store %arg7[%c0_11, %c0_12], %12 {strides = array<i32>} : memref<16x128xf32, #tpu.memory_space<vmem>>, vector<16x128xf32>,
    } else {
    }
    %c0 = arith.constant 0 : index
    %c0_1 = arith.constant 0 : index
    %3 = vector.load %arg7[%c0, %c0_1] : memref<16x128xf32, #tpu.memory_space<vmem>>, vector<16x128xf32>
    %c0_2 = arith.constant 0 : index
    %c0_3 = arith.constant 0 : index
    %4 = vector.load %arg3[%c0_2, %c0_3] : memref<16x32xbf16, #tpu.memory_space<vmem>>, vector<16x32xbf16>
    %c0_4 = arith.constant 0 : index
    %c0_5 = arith.constant 0 : index
    %5 = vector.load %arg4[%c0_4, %c0_5] : memref<32x128xbf16, #tpu.memory_space<vmem>>, vector<32x128xbf16>
    %cst = arith.constant dense<0.000000e+00> : vector<16x128xf32>
    %6 = tpu.matmul %4, %5, %cst {dimension_numbers = #tpu.dot_dimension_numbers<[1], [0], [0], [1], [0, 0, 1, 1], [], []>} : vector<16x32xbf16>, vector<32x128xbf16>, vector<16x128xf32> -> vector<16x128xf32>
    %7 = arith.addf %3, %6 : vector<16x128xf32>
    %c0_6 = arith.constant 0 : index
    %c0_7 = arith.constant 0 : index
    %8 = vector.load %arg7[%c0_6, %c0_7] : memref<16x128xf32, #tpu.memory_space<vmem>>, vector<16x128xf32>
    tpu.vector_store %arg7[%c0_6, %c0_7], %7 {strides = array<i32>} : memref<16x128xf32, #tpu.memory_space<vmem>>, vector<16x128xf32>,
    %c0_i32_8 = arith.constant 0 : i32
    %9 = arith.cmpi eq, %arg2, %c0_i32_8 : i32
    %10 = arith.extui %9 : i1 to i32
    %c0_i32_9 = arith.constant 0 : i32
    %11 = arith.cmpi ne, %10, %c0_i32_9 : i32
    scf.if %11 {
      %c0_10 = arith.constant 0 : index
      %c0_11 = arith.constant 0 : index
      %12 = vector.load %arg7[%c0_10, %c0_11] : memref<16x128xf32, #tpu.memory_space<vmem>>, vector<16x128xf32>
      %c0_12 = arith.constant 0 : index
      %c0_13 = arith.constant 0 : index
      %13 = vector.load %arg5[%c0_12, %c0_13] : memref<1x128xf32, #tpu.memory_space<vmem>>, vector<1x128xf32>
      %14 = vector.broadcast %13 : vector<1x128xf32> to vector<16x128xf32>
      %15 = arith.addf %12, %14 : vector<16x128xf32>
      %16 = arith.truncf %15 : vector<16x128xf32> to vector<16x128xbf16>
      %c0_14 = arith.constant 0 : index
      %c0_15 = arith.constant 0 : index
      %17 = vector.load %arg6[%c0_14, %c0_15] : memref<16x128xbf16, #tpu.memory_space<vmem>>, vector<16x128xbf16>
      tpu.vector_store %arg6[%c0_14, %c0_15], %16 {strides = array<i32>} : memref<16x128xbf16, #tpu.memory_space<vmem>>, vector<16x128xbf16>,
    } else {
    }
    return
  }
  func.func @transform_0(%arg0: i32, %arg1: i32, %arg2: i32) -> (i32, i32) {
    %c0_i32 = arith.constant 0 : i32
    return %arg0, %arg2 : i32, i32
  }
  func.func @transform_1(%arg0: i32, %arg1: i32, %arg2: i32) -> (i32, i32) {
    %c0_i32 = arith.constant 0 : i32
    return %arg2, %arg1 : i32, i32
  }
  func.func @transform_2(%arg0: i32, %arg1: i32, %arg2: i32) -> (i32, i32) {
    %c0_i32 = arith.constant 0 : i32
    %c0_i32_0 = arith.constant 0 : i32
    return %c0_i32, %arg1 : i32, i32
  }
  func.func @transform_3(%arg0: i32, %arg1: i32, %arg2: i32) -> (i32, i32) {
    %c0_i32 = arith.constant 0 : i32
    return %arg0, %arg1 : i32, i32
  }
}

</mosaic_0001>

<llo_original>
// kernel: tpu_custom_call.1
$region0: #{tpu_custom_call.1}
  #allocation0 [shape = 'u32[]', space=smem, size = 0x4, offset = 0x4, fixed_abs, tag = 'smem constant byte address 0x4 - core index']
  #allocation1 [shape = 'u32[144,128]{1,0:T(1,128)}', space=vmem, size = 0x12000, scoped, tag = 'internal scratch']
  #allocation2 [shape = 'f32[16,128]{1,0:T(8,128)}', space=vmem, size = 0x2000, scoped, tag = 'scratch operand']
  %s0 = inlined_call_operand.hbm [shape: bf16[16,32], index: 0, kind: input, shape index: {}]
  %s1 = inlined_call_operand.hbm [shape: bf16[32,128], index: 1, kind: input, shape index: {}]
  %s2 = inlined_call_operand.vmem [shape: f32[1,128], index: 2, kind: input, shape index: {}]
  %s3 = inlined_call_operand.hbm [shape: bf16[16,128], index: 3, kind: output, shape index: {}]
  %s4 = sld [smem:[#allocation0]]
  $region38: #{tpu_custom_call.1} parent=0
    _
  %s6 = ssub.s32 1, %s4
  %s7 = scalar_select 0, %s6, %s4
  $region1: #{tpu_custom_call.1} parent=0
    #allocation3 [shape = 'u8[4096]{0}', space=vmem, size = 0x1000, scoped, tag = 'input window, operand 0, single buffered']
    #allocation4 [shape = 's32[1]{0}', space=sflag, size = 0x4, scoped, tag = 'scoped memory for tpu_custom_call.1']
    #allocation5 [shape = 's32[1]{0}', space=sflag, size = 0x4, scoped, tag = 'scoped memory for tpu_custom_call.1']
    #allocation6 [shape = 'u8[8192]{0}', space=vmem, size = 0x2000, scoped, tag = 'input window, operand 1, single buffered']
    #allocation7 [shape = 's32[1]{0}', space=sflag, size = 0x4, scoped, tag = 'scoped memory for tpu_custom_call.1']
    #allocation8 [shape = 'u8[4096]{0}', space=vmem, size = 0x1000, scoped, tag = 'output window, operand 0, single buffered']
    %8 = vsyncpa [#allocation4], 0
    %9 = vsyncpa [#allocation7], 0
    %10 = vsyncpa [#allocation5], 0
    // Predicated region
    $region2: #{tpu_custom_call.1} parent=1 // pred_check
      _
    $region3: #{tpu_custom_call.1} parent=1 // pred_check_branch
      %12 = sbr.rel (0) target = $region5
    $region4: #{tpu_custom_call.1} parent=1 // pred_region
      %s14 = ssub.s32 128, 128
      %15 = vsyncadd [#allocation4], %s14
      %s16 = sshll.u32 [#allocation3], 4
      %s17 = int_to_ptr.vmem [resolvable:$true] %s16
      %22 = dma.hbm_to_vmem [thread:$0]  %s0, 128, %s17, [#allocation4], 64, 64, 4
    $region5: #{tpu_custom_call.1} parent=1 // pred_fallthru
      _
    // Predicated region
    $region6: #{tpu_custom_call.1} parent=1 // pred_check
      _
    $region7: #{tpu_custom_call.1} parent=1 // pred_check_branch
      %24 = sbr.rel (0) target = $region9
    $region8: #{tpu_custom_call.1} parent=1 // pred_region
      %s26 = ssub.s32 256, 256
      %27 = vsyncadd [#allocation7], %s26
      %s28 = sshll.u32 [#allocation6], 4
      %s29 = int_to_ptr.vmem [resolvable:$true] %s28
      %34 = dma.hbm_to_vmem [thread:$0]  %s1, 256, %s29, [#allocation7], 64, 64, 4
    $region9: #{tpu_custom_call.1} parent=1 // pred_fallthru
      _
    // Predicated region
    $region10: #{tpu_custom_call.1} parent=1 // pred_check
      _
    $region11: #{tpu_custom_call.1} parent=1 // pred_check_branch
      %36 = sbr.rel (0) target = $region13
    $region12: #{tpu_custom_call.1} parent=1 // pred_region
      _
    $region13: #{tpu_custom_call.1} parent=1 // pred_fallthru
      _
    // Predicated region
    $region14: #{tpu_custom_call.1} parent=1 // pred_check
      _
    $region15: #{tpu_custom_call.1} parent=1 // pred_check_branch
      %38 = sbr.rel (0) target = $region17
    $region16: #{tpu_custom_call.1} parent=1 // pred_region
      %39 = dma.done [#allocation4], 128
    $region17: #{tpu_custom_call.1} parent=1 // pred_fallthru
      _
    // Predicated region
    $region18: #{tpu_custom_call.1} parent=1 // pred_check
      _
    $region19: #{tpu_custom_call.1} parent=1 // pred_check_branch
      %41 = sbr.rel (0) target = $region21
    $region20: #{tpu_custom_call.1} parent=1 // pred_region
      %42 = dma.done [#allocation7], 256
    $region21: #{tpu_custom_call.1} parent=1 // pred_fallthru
      _
    %p44 = scmp.eq.s32.totalorder 0, 0
    // Predicated region
    $region22: #{tpu_custom_call.1} parent=1 // pred_check
      %p45 = pneg %p44
    $region23: #{tpu_custom_call.1} parent=1 // pred_check_branch
      %47 = sbr.rel (%p45) target = $region25
    $region24: #{tpu_custom_call.1} parent=1 // pred_region
      %48 = vst [vmem:[#allocation2] sm:$0xff] 0.0
      %49 = vst [vmem:[#allocation2 + $0x8] sm:$0xff] 0.0
    $region25: #{tpu_custom_call.1} parent=1 // pred_fallthru
      _
    %v50 = vld [vmem:[#allocation2] sm:$0xff]
    %v51 = vld [vmem:[#allocation2 + $0x8] sm:$0xff]
    %v52 = vld [vmem:[#allocation3] sm:$0xf]
    %v53 = vld [vmem:[#allocation3 + $0x4] sm:$0xf]
    %v54 = vld [vmem:[#allocation6] sm:$0xf]
    %v55 = vld [vmem:[#allocation6 + $0x4] sm:$0xf]
    %v56 = vld [vmem:[#allocation6 + $0x8] sm:$0xf]
    %v57 = vld [vmem:[#allocation6 + $0xc] sm:$0xf]
    %v60 = vunpack.c.l.b16 %v52
    %v61 = vunpack.c.l.b16 %v53
    %v62 = vpack.c.b16 %v61, %v60
    %v67 = vunpack.c.l.b16 %v54
    %v68 = vunpack.c.l.b16 %v55
    %v69 = vunpack.c.l.b16 %v56
    %v70 = vunpack.c.l.b16 %v57
    %v71 = vpack.c.b16 %v68, %v67
    %v72 = vpack.c.b16 %v70, %v69
    %vm75 = vcmask 261120
    %v77 = vsel %vm75, %v62, 0
    %79 = vmatprep.subr.bf16.mxu0 0
    %80 = vmatpush1.bf16.msra.mxu0 %v71
    %81 = vmatprep.subr.bf16.mxu0 0
    %82 = vmatpush1.bf16.msra.mxu0 %v72
    %83 = vmatprep.subr.bf16.mxu0 0
    %84 = vmatpush1.bf16.msra.mxu0 0
    %85 = vmatprep.subr.bf16.mxu0 0
    %86 = vmatpush1.bf16.msra.mxu0 0
    %87 = vmatprep.subr.bf16.mxu0 0
    %88 = vmatpush1.bf16.msra.mxu0 0
    %89 = vmatprep.subr.bf16.mxu0 0
    %90 = vmatpush1.bf16.msra.mxu0 0
    %91 = vmatprep.subr.bf16.mxu0 0
    %92 = vmatpush1.bf16.msra.mxu0 0
    %93 = vmatprep.subr.bf16.mxu0 0
    %94 = vmatpush1.bf16.msra.mxu0 0
    %95 = vmatprep.subr.bf16.mxu0 0
    %96 = vmatpush1.bf16.msra.mxu0 0
    %97 = vmatprep.subr.bf16.mxu0 0
    %98 = vmatpush1.bf16.msra.mxu0 0
    %99 = vmatprep.subr.bf16.mxu0 0
    %100 = vmatpush1.bf16.msra.mxu0 0
    %101 = vmatprep.subr.bf16.mxu0 0
    %102 = vmatpush1.bf16.msra.mxu0 0
    %103 = vmatprep.subr.bf16.mxu0 0
    %104 = vmatpush1.bf16.msra.mxu0 0
    %105 = vmatprep.subr.bf16.mxu0 0
    %106 = vmatpush1.bf16.msra.mxu0 0
    %107 = vmatprep.subr.bf16.mxu0 0
    %108 = vmatpush1.bf16.msra.mxu0 0
    %109 = vmatprep.subr.bf16.mxu0 0
    %110 = vmatpush1.bf16.msra.mxu0 0
    %111 = vmatprep.mubr.bf16.mxu0 0
    %112 = vmatmul.mubr.bf16.gmra.mrb[0].mxu0 %v77
    %v113 = vpop.f32.mrb[0].mxu0
    %v114 = vadd.f32 0.0, %v113
    %v115 = vpop.f32.mrb[0].mxu0
    %v116 = vpop.f32.mrb[0].mxu0
    %v117 = vadd.f32 0.0, %v116
    %v118 = vpop.f32.mrb[0].mxu0
    %119 = vdwg.mxu0
    %v120 = vadd.f32 %v50, %v114
    %v121 = vadd.f32 %v51, %v117
    %122 = vst [vmem:[#allocation2] sm:$0xff] %v120
    %123 = vst [vmem:[#allocation2 + $0x8] sm:$0xff] %v121
    // Predicated region
    $region26: #{tpu_custom_call.1} parent=1 // pred_check
      %p124 = pneg %p44
    $region27: #{tpu_custom_call.1} parent=1 // pred_check_branch
      %126 = sbr.rel (%p124) target = $region29
    $region28: #{tpu_custom_call.1} parent=1 // pred_region
      %v127 = vld [vmem:[#allocation2] sm:$0xff]
      %v128 = vld [vmem:[#allocation2 + $0x8] sm:$0xff]
      %v129 = vld [vmem:[%s2] sm:$0x1]
      %v131 = vlaneseq
      %v132 = vshrl.u32 %v131, 7
      %v133 = vsub.s32 0, %v132
      %v134 = vrot.slane %v129, %v133
      %v136 = vadd.f32 %v127, %v134
      %v137 = vadd.f32 %v128, %v134
      %v138 = vpack.c.bf16 %v137, %v136
      %v140 = vunpack.c.l.b16 %v138
      %v141 = vunpack.c.h.b16 %v138
      %v142 = vpack.c.b16 %v140, %v140
      %v143 = vpack.c.b16 %v141, %v141
      %146 = vst [vmem:[#allocation8] sm:$0xf] %v142
      %147 = vst [vmem:[#allocation8 + $0x4] sm:$0xf] %v143
    $region29: #{tpu_custom_call.1} parent=1 // pred_fallthru
      _
    // Predicated region
    $region30: #{tpu_custom_call.1} parent=1 // pred_check
      _
    $region31: #{tpu_custom_call.1} parent=1 // pred_check_branch
      %149 = sbr.rel (0) target = $region33
    $region32: #{tpu_custom_call.1} parent=1 // pred_region
      %s151 = ssub.s32 128, 128
      %152 = vsyncadd [#allocation5], %s151
      %s153 = sshll.u32 [#allocation8], 4
      %s154 = int_to_ptr.vmem [resolvable:$true] %s153
      %159 = dma.vmem_to_hbm [thread:$0]  %s154, 128, %s3, [#allocation5], 64, 64, 4
    $region33: #{tpu_custom_call.1} parent=1 // pred_fallthru
      _
    // Predicated region
    $region34: #{tpu_custom_call.1} parent=1 // pred_check
      _
    $region35: #{tpu_custom_call.1} parent=1 // pred_check_branch
      %161 = sbr.rel (0) target = $region37
    $region36: #{tpu_custom_call.1} parent=1 // pred_region
      %162 = dma.done [#allocation5], 128
    $region37: #{tpu_custom_call.1} parent=1 // pred_fallthru
      _
    %163 = vsyncpa [#allocation4], 1
    %164 = vsyncpa [#allocation7], 1
    %165 = vsyncpa [#allocation5], 1

</llo_original>
